<compile_context>
chip_gen: v5e
topology: v5e:2x2
jax: 0.10.0
libtpu: 0.0.40
codegen_flags: <defaults>
</compile_context>

<pallas_src>
import math

import jax
import jax.numpy as jnp
from jax.experimental import pallas as pl
from jax.experimental.pallas import tpu as pltpu


def _gcn_kernel(x_ref, w_ref, adj_ref, o_ref):
    # x_ref:   (tb*n, d)  rows of `inputs` for tb batch elements (pre-flattened)
    # w_ref:   (d, d)     shared weight
    # adj_ref: (tb, n, n) normalized (transposed) adjacency for the same elements
    # o_ref:   (tb, n, d) output
    tb, n, _ = adj_ref.shape
    d = w_ref.shape[1]

    # Shared-weight matmul: batch collapsed into the MXU M dim, one pass, f32 acc.
    h = jnp.dot(x_ref[...], w_ref[...], preferred_element_type=jnp.float32)  # (tb*n, d)
    # Major-dim split only (tb*n is sublane-aligned by the tile picker) -> no relayout.
    h3 = h.reshape(tb, n, d)

    # Adjacency aggregation in f32.  adj may arrive as bf16 purely to halve its
    # DMA bytes; casting it back up is a VPU op and the VALU is otherwise idle.
    adj = adj_ref[...].astype(jnp.float32)

    if n <= 16:
        # Tiny-n path: n broadcast-FMAs on the VPU instead of serialized
        # sub-1%-utilization MXU passes (MXU push + result-FIFO pop latency).
        a = adj[:, :, 0:1] * h3[:, 0:1, :]
        for k in range(1, n):
            a = a + adj[:, :, k:k + 1] * h3[:, k:k + 1, :]
    else:
        # Single batched contraction: (tb, n, n) @ (tb, n, d) -> (tb, n, d).
        a = jnp.einsum("bnm,bmd->bnd", adj, h3,
                       preferred_element_type=jnp.float32)

    # Exact (erf-based) GELU, computed once for the whole (tb, n, d) tile.
    inv_sqrt2 = jnp.float32(1.0 / math.sqrt(2.0))
    g = 0.5 * a * (1.0 + jax.lax.erf(a * inv_sqrt2))
    # TODO(synk): training-mode dropout would mask `g` here (prng_seed +
    # stateful_bernoulli); eval mode is the identity.
    o_ref[...] = g.astype(o_ref.dtype)


def _vmem_plan():
    """Return (vmem_limit_bytes, prefer_two_steps) for the local TPU generation."""
    try:
        phys = pltpu.get_tpu_info().vmem_capacity_bytes
    except Exception:
        phys = 64 << 20  # conservative fallback: assume the smallest (v7x-like) VMEM
    if phys <= (64 << 20):
        # v7x-class: 64 MiB physical per TensorCore, 2 TensorCores per chip.
        return 48 << 20, True
    # v5e / v6e: 128 MiB physical VMEM, single TensorCore.
    return 100 << 20, False


def _pick_batch_tile(b, n, d, in_itemsize, out_itemsize, *,
                     vmem_limit_bytes, prefer_two_steps):
    """Largest batch tile TB (dividing b) whose DOUBLE-BUFFERED tiles fit VMEM."""
    # Per-step VMEM ~ 2x (x tile + adj tile + out tile)  [BlockSpec double-buffers]
    #               + 2x weight tile + ~4 MiB compiler-internal headroom.
    w_bytes = d * d * in_itemsize
    headroom = 4 << 20
    budget = max(1 << 20, (vmem_limit_bytes - headroom - 2 * w_bytes) // 2)
    per_elem = n * d * in_itemsize + n * n * in_itemsize + n * d * out_itemsize
    cap = max(1, budget // max(per_elem, 1))
    if prefer_two_steps and b >= 2 and (b // 2) * n >= 512:
        # 2-TensorCore chips: keep >= 2 "parallel" grid steps as long as each
        # step still carries a long (>= 512-row) MXU / DMA stream.
        cap = min(cap, b // 2)
    cap = min(cap, b)
    tb = 1
    for cand in range(1, cap + 1):
        if b % cand != 0:
            continue
        # Keep the flattened-x block sublane-aligned (8) unless it covers the
        # full array (full dims are exempt from the (8,128) rule).
        if (cand * n) % 8 != 0 and cand != b:
            continue
        tb = cand
    if (tb * n) % 8 != 0 and tb != b:
        tb = b  # safety fallback for odd n
    return tb


def gcn_layer_forward(inputs, w, normalized_adj_t, *, mxu_dtype=None, adj_buffers=None):
    """inputs: (b, n, d), w: (d, d), normalized_adj_t: (b, n, n).

    mxu_dtype: optional narrower dtype (e.g. jnp.bfloat16) fed to the MXU / DMA'd
    for adj; h and all accumulation/epilogue stay in f32.
    adj_buffers: optional pipeline depth (>2) for the adj DMA stream (v5e).
    """
    b, n, d = inputs.shape
    assert w.shape == (d, d)
    assert normalized_adj_t.shape == (b, n, n)
    out_dtype = inputs.dtype

    x, wm, adj = inputs, w, normalized_adj_t
    if mxu_dtype is not None:
        # NOTE: only a real HBM-bytes win if the caller already holds bf16 arrays
        # or XLA fuses these casts into the producers (see header comment).
        x = x.astype(mxu_dtype)
        wm = wm.astype(mxu_dtype)
        adj = adj.astype(mxu_dtype)

    vmem_limit, prefer_two_steps = _vmem_plan()
    tb = _pick_batch_tile(b, n, d, x.dtype.itemsize, out_dtype.itemsize,
                          vmem_limit_bytes=vmem_limit,
                          prefer_two_steps=prefer_two_steps)
    grid = (b // tb,)

    # Wrapper-side flatten (free, contiguous): one (tb*n, d) x (d, d) MXU pass per step.
    x_flat = x.reshape(b * n, d)

    adj_spec = pl.BlockSpec((tb, n, n), lambda i: (i, 0, 0))
    if adj_buffers is not None and adj_buffers > 2:
        # Deepen the dominant adj DMA stream only if a trace shows it exposed.
        adj_spec = pl.BlockSpec((tb, n, n), lambda i: (i, 0, 0),
                                pipeline_mode=pl.Buffered(adj_buffers))

    flops = 2 * b * n * d * d + 2 * b * n * n * d
    bytes_accessed = (int(x_flat.size) + int(wm.size) + int(adj.size)) * x.dtype.itemsize \
                     + b * n * d * out_dtype.itemsize

    return pl.pallas_call(
        _gcn_kernel,
        out_shape=jax.ShapeDtypeStruct((b, n, d), out_dtype),
        grid_spec=pltpu.PrefetchScalarGridSpec(
            num_scalar_prefetch=0,
            grid=grid,
            in_specs=[
                pl.BlockSpec((tb * n, d), lambda i: (i, 0)),   # flattened inputs
                pl.BlockSpec((d, d), lambda i: (0, 0)),        # shared weight
                adj_spec,                                      # normalized adj_t
            ],
            out_specs=pl.BlockSpec((tb, n, d), lambda i: (i, 0, 0)),
        ),
        compiler_params=pltpu.CompilerParams(
            dimension_semantics=("parallel",),
            vmem_limit_bytes=vmem_limit,
        ),
        cost_estimate=pl.CostEstimate(
            flops=flops,
            # Approximate: erf may lower to a VALU polynomial rather than an EUP op.
            transcendentals=b * n * d,
            bytes_accessed=bytes_accessed,
        ),
    )(x_flat, wm, adj)


def _reference(inputs, w, adj_t):
    h = jnp.einsum("bnd,de->bne", inputs, w)
    h = jnp.einsum("bnm,bmd->bnd", adj_t, h)
    return jax.nn.gelu(h, approximate=False)


if __name__ == "__main__":
    key = jax.random.PRNGKey(0)
    b, n_node, d = 2, 8, 32
    k_x, k_w, k_adj = jax.random.split(key, 3)

    # Deterministic xavier_uniform-style init for w (input_size == output_size == d).
    bound = math.sqrt(6.0 / (d + d))
    w = jax.random.uniform(k_w, (d, d), jnp.float32, minval=-bound, maxval=bound)
    inputs = jax.random.normal(k_x, (b, n_node, d), jnp.float32)

    # Normalized (transposed) adjacency: row j holds 1/in_degree(j) per incoming edge.
    raw = jax.random.uniform(k_adj, (b, n_node, n_node), jnp.float32)
    adj = (raw > 0.5).astype(jnp.float32)
    in_deg = jnp.clip(adj.sum(axis=-1, keepdims=True), 1.0, None)
    normalized_adj_t = adj / in_deg

    ref = _reference(inputs, w, normalized_adj_t)

    # f32 path: matches the exact-erf f32 reference tightly.
    out_f32 = jax.block_until_ready(gcn_layer_forward(inputs, w, normalized_adj_t))
    assert out_f32.shape == (b, n_node, d)
    assert jnp.allclose(out_f32, ref, atol=1e-5, rtol=1e-5), "f32 path mismatch"

    # bf16 MXU/DMA path: h and accumulation stay f32, so only input quantization remains.
    out_bf16 = jax.block_until_ready(
        gcn_layer_forward(inputs, w, normalized_adj_t, mxu_dtype=jnp.bfloat16))
    assert out_bf16.dtype == jnp.float32
    assert jnp.allclose(out_bf16, ref, atol=5e-2, rtol=5e-2), "bf16 path mismatch"

    print("KERNEL_OK")
</pallas_src>

<mosaic_0001>
module attributes {stable_mosaic.version = 11 : i64} {
  func.func @_gcn_kernel(%arg0: i32, %arg1: memref<16x32xf32, #tpu.memory_space<vmem>>, %arg2: memref<32x32xf32, #tpu.memory_space<vmem>>, %arg3: memref<2x8x8xf32, #tpu.memory_space<vmem>>, %arg4: memref<2x8x32xf32, #tpu.memory_space<vmem>>) attributes {dimension_semantics = [#tpu.dimension_semantics<parallel>], iteration_bounds = array<i64: 1>, scalar_prefetch = 0 : i64, scratch_operands = 0 : i64, tpu.core_type = #tpu.core_type<tc>, window_params = [{transform_indices = @transform_0, window_bounds = array<i64: 16, 32>}, {pipeline_mode = #tpu.pipeline_mode<synchronous>, transform_indices = @transform_1, window_bounds = array<i64: 32, 32>}, {transform_indices = @transform_2, window_bounds = array<i64: 2, 8, 8>}, {transform_indices = @transform_3, window_bounds = array<i64: 2, 8, 32>}]} {
    %c0 = arith.constant 0 : index
    %c0_0 = arith.constant 0 : index
    %0 = vector.load %arg1[%c0, %c0_0] : memref<16x32xf32, #tpu.memory_space<vmem>>, vector<16x32xf32>
    %c0_1 = arith.constant 0 : index
    %c0_2 = arith.constant 0 : index
    %1 = vector.load %arg2[%c0_1, %c0_2] : memref<32x32xf32, #tpu.memory_space<vmem>>, vector<32x32xf32>
    %cst = arith.constant dense<0.000000e+00> : vector<16x32xf32>
    %2 = tpu.matmul %0, %1, %cst {dimension_numbers = #tpu.dot_dimension_numbers<[1], [0], [0], [1], [0, 0, 1, 1], [], []>} : vector<16x32xf32>, vector<32x32xf32>, vector<16x32xf32> -> vector<16x32xf32>
    %3 = vector.shape_cast %2 : vector<16x32xf32> to vector<2x8x32xf32>
    %c0_3 = arith.constant 0 : index
    %c0_4 = arith.constant 0 : index
    %c0_5 = arith.constant 0 : index
    %4 = vector.load %arg3[%c0_3, %c0_4, %c0_5] : memref<2x8x8xf32, #tpu.memory_space<vmem>>, vector<2x8x8xf32>
    %5 = vector.extract_strided_slice %4 {offsets = [0, 0, 0], sizes = [2, 8, 1], strides = [1, 1, 1]} : vector<2x8x8xf32> to vector<2x8x1xf32>
    %6 = vector.extract_strided_slice %3 {offsets = [0, 0, 0], sizes = [2, 1, 32], strides = [1, 1, 1]} : vector<2x8x32xf32> to vector<2x1x32xf32>
    %7 = vector.broadcast %5 : vector<2x8x1xf32> to vector<2x8x32xf32>
    %8 = vector.broadcast %6 : vector<2x1x32xf32> to vector<2x8x32xf32>
    %9 = arith.mulf %7, %8 : vector<2x8x32xf32>
    %10 = vector.extract_strided_slice %4 {offsets = [0, 0, 1], sizes = [2, 8, 1], strides = [1, 1, 1]} : vector<2x8x8xf32> to vector<2x8x1xf32>
    %11 = vector.extract_strided_slice %3 {offsets = [0, 1, 0], sizes = [2, 1, 32], strides = [1, 1, 1]} : vector<2x8x32xf32> to vector<2x1x32xf32>
    %12 = vector.broadcast %10 : vector<2x8x1xf32> to vector<2x8x32xf32>
    %13 = vector.broadcast %11 : vector<2x1x32xf32> to vector<2x8x32xf32>
    %14 = arith.mulf %12, %13 : vector<2x8x32xf32>
    %15 = arith.addf %9, %14 : vector<2x8x32xf32>
    %16 = vector.extract_strided_slice %4 {offsets = [0, 0, 2], sizes = [2, 8, 1], strides = [1, 1, 1]} : vector<2x8x8xf32> to vector<2x8x1xf32>
    %17 = vector.extract_strided_slice %3 {offsets = [0, 2, 0], sizes = [2, 1, 32], strides = [1, 1, 1]} : vector<2x8x32xf32> to vector<2x1x32xf32>
    %18 = vector.broadcast %16 : vector<2x8x1xf32> to vector<2x8x32xf32>
    %19 = vector.broadcast %17 : vector<2x1x32xf32> to vector<2x8x32xf32>
    %20 = arith.mulf %18, %19 : vector<2x8x32xf32>
    %21 = arith.addf %15, %20 : vector<2x8x32xf32>
    %22 = vector.extract_strided_slice %4 {offsets = [0, 0, 3], sizes = [2, 8, 1], strides = [1, 1, 1]} : vector<2x8x8xf32> to vector<2x8x1xf32>
    %23 = vector.extract_strided_slice %3 {offsets = [0, 3, 0], sizes = [2, 1, 32], strides = [1, 1, 1]} : vector<2x8x32xf32> to vector<2x1x32xf32>
    %24 = vector.broadcast %22 : vector<2x8x1xf32> to vector<2x8x32xf32>
    %25 = vector.broadcast %23 : vector<2x1x32xf32> to vector<2x8x32xf32>
    %26 = arith.mulf %24, %25 : vector<2x8x32xf32>
    %27 = arith.addf %21, %26 : vector<2x8x32xf32>
    %28 = vector.extract_strided_slice %4 {offsets = [0, 0, 4], sizes = [2, 8, 1], strides = [1, 1, 1]} : vector<2x8x8xf32> to vector<2x8x1xf32>
    %29 = vector.extract_strided_slice %3 {offsets = [0, 4, 0], sizes = [2, 1, 32], strides = [1, 1, 1]} : vector<2x8x32xf32> to vector<2x1x32xf32>
    %30 = vector.broadcast %28 : vector<2x8x1xf32> to vector<2x8x32xf32>
    %31 = vector.broadcast %29 : vector<2x1x32xf32> to vector<2x8x32xf32>
    %32 = arith.mulf %30, %31 : vector<2x8x32xf32>
    %33 = arith.addf %27, %32 : vector<2x8x32xf32>
    %34 = vector.extract_strided_slice %4 {offsets = [0, 0, 5], sizes = [2, 8, 1], strides = [1, 1, 1]} : vector<2x8x8xf32> to vector<2x8x1xf32>
    %35 = vector.extract_strided_slice %3 {offsets = [0, 5, 0], sizes = [2, 1, 32], strides = [1, 1, 1]} : vector<2x8x32xf32> to vector<2x1x32xf32>
    %36 = vector.broadcast %34 : vector<2x8x1xf32> to vector<2x8x32xf32>
    %37 = vector.broadcast %35 : vector<2x1x32xf32> to vector<2x8x32xf32>
    %38 = arith.mulf %36, %37 : vector<2x8x32xf32>
    %39 = arith.addf %33, %38 : vector<2x8x32xf32>
    %40 = vector.extract_strided_slice %4 {offsets = [0, 0, 6], sizes = [2, 8, 1], strides = [1, 1, 1]} : vector<2x8x8xf32> to vector<2x8x1xf32>
    %41 = vector.extract_strided_slice %3 {offsets = [0, 6, 0], sizes = [2, 1, 32], strides = [1, 1, 1]} : vector<2x8x32xf32> to vector<2x1x32xf32>
    %42 = vector.broadcast %40 : vector<2x8x1xf32> to vector<2x8x32xf32>
    %43 = vector.broadcast %41 : vector<2x1x32xf32> to vector<2x8x32xf32>
    %44 = arith.mulf %42, %43 : vector<2x8x32xf32>
    %45 = arith.addf %39, %44 : vector<2x8x32xf32>
    %46 = vector.extract_strided_slice %4 {offsets = [0, 0, 7], sizes = [2, 8, 1], strides = [1, 1, 1]} : vector<2x8x8xf32> to vector<2x8x1xf32>
    %47 = vector.extract_strided_slice %3 {offsets = [0, 7, 0], sizes = [2, 1, 32], strides = [1, 1, 1]} : vector<2x8x32xf32> to vector<2x1x32xf32>
    %48 = vector.broadcast %46 : vector<2x8x1xf32> to vector<2x8x32xf32>
    %49 = vector.broadcast %47 : vector<2x1x32xf32> to vector<2x8x32xf32>
    %50 = arith.mulf %48, %49 : vector<2x8x32xf32>
    %51 = arith.addf %45, %50 : vector<2x8x32xf32>
    %cst_6 = arith.constant 5.000000e-01 : f32
    %52 = vector.broadcast %cst_6 : f32 to vector<2x8x32xf32>
    %53 = arith.mulf %52, %51 : vector<2x8x32xf32>
    %cst_7 = arith.constant 0.707106769 : f32
    %54 = vector.broadcast %cst_7 : f32 to vector<2x8x32xf32>
    %55 = arith.mulf %51, %54 : vector<2x8x32xf32>
    %56 = math.erf %55 : vector<2x8x32xf32>
    %cst_8 = arith.constant 1.000000e+00 : f32
    %57 = vector.broadcast %cst_8 : f32 to vector<2x8x32xf32>
    %58 = arith.addf %57, %56 : vector<2x8x32xf32>
    %59 = arith.mulf %53, %58 : vector<2x8x32xf32>
    %c0_9 = arith.constant 0 : index
    %c0_10 = arith.constant 0 : index
    %c0_11 = arith.constant 0 : index
    %60 = vector.load %arg4[%c0_9, %c0_10, %c0_11] : memref<2x8x32xf32, #tpu.memory_space<vmem>>, vector<2x8x32xf32>
    tpu.vector_store %arg4[%c0_9, %c0_10, %c0_11], %59 {strides = array<i32>} : memref<2x8x32xf32, #tpu.memory_space<vmem>>, vector<2x8x32xf32>,
    return
  }
  func.func @transform_0(%arg0: i32) -> (i32, i32) {
    %c0_i32 = arith.constant 0 : i32
    %c0_i32_0 = arith.constant 0 : i32
    return %arg0, %c0_i32 : i32, i32
  }
  func.func @transform_1(%arg0: i32) -> (i32, i32) {
    %c0_i32 = arith.constant 0 : i32
    %c0_i32_0 = arith.constant 0 : i32
    %c0_i32_1 = arith.constant 0 : i32
    return %c0_i32, %c0_i32_0 : i32, i32
  }
  func.func @transform_2(%arg0: i32) -> (i32, i32, i32) {
    %c0_i32 = arith.constant 0 : i32
    %c0_i32_0 = arith.constant 0 : i32
    %c0_i32_1 = arith.constant 0 : i32
    return %arg0, %c0_i32, %c0_i32_0 : i32, i32, i32
  }
  func.func @transform_3(%arg0: i32) -> (i32, i32, i32) {
    %c0_i32 = arith.constant 0 : i32
    %c0_i32_0 = arith.constant 0 : i32
    %c0_i32_1 = arith.constant 0 : i32
    return %arg0, %c0_i32, %c0_i32_0 : i32, i32, i32
  }
}

</mosaic_0001>

<llo_original>
// kernel: tpu_custom_call.1
$region0: #{tpu_custom_call.1}
  #allocation0 [shape = 'u32[]', space=smem, size = 0x4, offset = 0x4, fixed_abs, tag = 'smem constant byte address 0x4 - core index']
  #allocation1 [shape = 'u32[72,128]{1,0:T(1,128)}', space=vmem, size = 0x9000, scoped, tag = 'internal scratch']
  %s0 = inlined_call_operand.hbm [shape: f32[16,32], index: 0, kind: input, shape index: {}]
  %s1 = inlined_call_operand.hbm [shape: f32[32,32], index: 1, kind: input, shape index: {}]
  %s2 = inlined_call_operand.hbm [shape: f32[2,8,8], index: 2, kind: input, shape index: {}]
  %s3 = inlined_call_operand.hbm [shape: f32[2,8,32], index: 3, kind: output, shape index: {}]
  %s4 = sld [smem:[#allocation0]]
  $region34: #{tpu_custom_call.1} parent=0
    _
  %s6 = ssub.s32 1, %s4
  %s7 = scalar_select 0, %s6, %s4
  $region1: #{tpu_custom_call.1} parent=0
    #allocation2 [shape = 'u8[8192]{0}', space=vmem, size = 0x2000, scoped, tag = 'input window, operand 0, single buffered']
    #allocation3 [shape = 's32[1]{0}', space=sflag, size = 0x4, scoped, tag = 'scoped memory for tpu_custom_call.1']
    #allocation4 [shape = 's32[1]{0}', space=sflag, size = 0x4, scoped, tag = 'scoped memory for tpu_custom_call.1']
    #allocation5 [shape = 'u8[16384]{0}', space=vmem, size = 0x4000, scoped, tag = 'input window, operand 1, single buffered']
    #allocation6 [shape = 's32[1]{0}', space=sflag, size = 0x4, scoped, tag = 'scoped memory for tpu_custom_call.1']
    #allocation7 [shape = 'u8[8192]{0}', space=vmem, size = 0x2000, scoped, tag = 'input window, operand 2, single buffered']
    #allocation8 [shape = 'u8[8192]{0}', space=vmem, size = 0x2000, scoped, tag = 'output window, operand 0, single buffered']
    %8 = vsyncpa [#allocation3], 0
    %9 = vsyncpa [#allocation6], 0
    %10 = vsyncpa [#allocation4], 0
    // Predicated region
    $region2: #{tpu_custom_call.1} parent=1 // pred_check
      _
    $region3: #{tpu_custom_call.1} parent=1 // pred_check_branch
      %12 = sbr.rel (0) target = $region5
    $region4: #{tpu_custom_call.1} parent=1 // pred_region
      %14 = vsyncadd [#allocation3], 0
      %s15 = sshll.u32 %s0, 4
      %s16 = int_to_ptr.hbm [resolvable:$true] %s15
      %s17 = sshll.u32 [#allocation2], 4
      %s18 = int_to_ptr.vmem [resolvable:$true] %s17
      %23 = dma.hbm_to_vmem [thread:$0]  %s16, 256, %s18, [#allocation3], 128, 128, 8
    $region5: #{tpu_custom_call.1} parent=1 // pred_fallthru
      _
    // Predicated region
    $region6: #{tpu_custom_call.1} parent=1 // pred_check
      _
    $region7: #{tpu_custom_call.1} parent=1 // pred_check_branch
      %25 = sbr.rel (0) target = $region9
    $region8: #{tpu_custom_call.1} parent=1 // pred_region
      %27 = vsyncadd [#allocation6], 0
      %s28 = sshll.u32 %s1, 4
      %s29 = int_to_ptr.hbm [resolvable:$true] %s28
      %s30 = sshll.u32 [#allocation5], 4
      %s31 = int_to_ptr.vmem [resolvable:$true] %s30
      %36 = dma.hbm_to_vmem [thread:$0]  %s29, 512, %s31, [#allocation6], 128, 128, 8
    $region9: #{tpu_custom_call.1} parent=1 // pred_fallthru
      _
    // Predicated region
    $region10: #{tpu_custom_call.1} parent=1 // pred_check
      _
    $region11: #{tpu_custom_call.1} parent=1 // pred_check_branch
      %38 = sbr.rel (0) target = $region13
    $region12: #{tpu_custom_call.1} parent=1 // pred_region
      %40 = vsyncadd [#allocation6], 0
      %s41 = sshll.u32 %s2, 4
      %s42 = int_to_ptr.hbm [resolvable:$true] %s41
      %s43 = sshll.u32 [#allocation7], 4
      %s44 = int_to_ptr.vmem [resolvable:$true] %s43
      %49 = dma.hbm_to_vmem [thread:$0]  %s42, 256, %s44, [#allocation6], 128, 128, 8
    $region13: #{tpu_custom_call.1} parent=1 // pred_fallthru
      _
    // Predicated region
    $region14: #{tpu_custom_call.1} parent=1 // pred_check
      _
    $region15: #{tpu_custom_call.1} parent=1 // pred_check_branch
      %51 = sbr.rel (0) target = $region17
    $region16: #{tpu_custom_call.1} parent=1 // pred_region
      %53 = dma.done [#allocation3], 256
    $region17: #{tpu_custom_call.1} parent=1 // pred_fallthru
      _
    // Predicated region
    $region18: #{tpu_custom_call.1} parent=1 // pred_check
      _
    $region19: #{tpu_custom_call.1} parent=1 // pred_check_branch
      %55 = sbr.rel (0) target = $region21
    $region20: #{tpu_custom_call.1} parent=1 // pred_region
      %57 = dma.done [#allocation6], 512
    $region21: #{tpu_custom_call.1} parent=1 // pred_fallthru
      _
    // Predicated region
    $region22: #{tpu_custom_call.1} parent=1 // pred_check
      _
    $region23: #{tpu_custom_call.1} parent=1 // pred_check_branch
      %59 = sbr.rel (0) target = $region25
    $region24: #{tpu_custom_call.1} parent=1 // pred_region
      %61 = dma.done [#allocation6], 256
    $region25: #{tpu_custom_call.1} parent=1 // pred_fallthru
      _
    %v62 = vld [vmem:[#allocation2] sm:$0xff]
    %v63 = vld [vmem:[#allocation2 + $0x8] sm:$0xff]
    %v64 = vld [vmem:[#allocation5] sm:$0xff]
    %v65 = vld [vmem:[#allocation5 + $0x8] sm:$0xff]
    %v66 = vld [vmem:[#allocation5 + $0x10] sm:$0xff]
    %v67 = vld [vmem:[#allocation5 + $0x18] sm:$0xff]
    %vm68 = vcmask 261120
    %v70 = vsel %vm68, %v62, 0
    %v73 = vsel %vm68, %v63, 0
    %75 = vmatpush.msra.mxu0 0.0
    %76 = vmatpush.msra.mxu0 0.0
    %77 = vmatpush.msra.mxu0 0.0
    %78 = vmatpush.msra.mxu0 0.0
    %79 = vmatpush.msra.mxu0 0.0
    %80 = vmatpush.msra.mxu0 0.0
    %81 = vmatpush.msra.mxu0 0.0
    %82 = vmatpush.msra.mxu0 0.0
    %83 = vmatpush.msra.mxu0 0.0
    %84 = vmatpush.msra.mxu0 0.0
    %85 = vmatpush.msra.mxu0 0.0
    %86 = vmatpush.msra.mxu0 0.0
    %87 = vmatpush.msra.mxu0 %v67
    %88 = vmatpush.msra.mxu0 %v66
    %89 = vmatpush.msra.mxu0 %v65
    %90 = vmatpush.msra.mxu0 %v64
    %91 = vmatmul.f32.gmra.mxu0 %v70
    %v92 = vpop.f32.mrf.mxu0
    %v93 = vadd.f32 0.0, %v92
    %94 = vmatmul.f32.gmra.mxu0 %v73
    %v95 = vpop.f32.mrf.mxu0
    %v96 = vadd.f32 0.0, %v95
    %97 = vdwg.mxu0
    %v98 = vld [vmem:[#allocation7] sm:$0xff]
    %v99 = vld [vmem:[#allocation7 + $0x8] sm:$0xff]
    %101 = vset.pattern.permute.xlu0 0
    %102 = vperm.xlu0 %101, %v98
    %v103 = vpop.permute.xlu0 %102
    %106 = vset.pattern.permute.xlu0 0
    %107 = vperm.xlu0 %106, %v99
    %v108 = vpop.permute.xlu0 %107
    %v110 = vperm.slane %v93, 0
    %v111 = vperm.slane %v96, 0
    %v112 = vmul.f32 %v103, %v110
    %v113 = vmul.f32 %v108, %v111
    %114 = vset.pattern.permute.xlu0 1
    %115 = vperm.xlu0 %114, %v98
    %v116 = vpop.permute.xlu0 %115
    %118 = vset.pattern.permute.xlu0 1
    %119 = vperm.xlu0 %118, %v99
    %v120 = vpop.permute.xlu0 %119
    %v122 = vperm.slane %v93, 1
    %v123 = vperm.slane %v96, 1
    %v124 = vmul.f32 %v116, %v122
    %v125 = vmul.f32 %v120, %v123
    %v126 = vadd.f32 %v112, %v124
    %v127 = vadd.f32 %v113, %v125
    %128 = vset.pattern.permute.xlu0 2
    %129 = vperm.xlu0 %128, %v98
    %v130 = vpop.permute.xlu0 %129
    %132 = vset.pattern.permute.xlu0 2
    %133 = vperm.xlu0 %132, %v99
    %v134 = vpop.permute.xlu0 %133
    %v136 = vperm.slane %v93, 2
    %v137 = vperm.slane %v96, 2
    %v138 = vmul.f32 %v130, %v136
    %v139 = vmul.f32 %v134, %v137
    %v140 = vadd.f32 %v126, %v138
    %v141 = vadd.f32 %v127, %v139
    %142 = vset.pattern.permute.xlu0 3
    %143 = vperm.xlu0 %142, %v98
    %v144 = vpop.permute.xlu0 %143
    %146 = vset.pattern.permute.xlu0 3
    %147 = vperm.xlu0 %146, %v99
    %v148 = vpop.permute.xlu0 %147
    %v150 = vperm.slane %v93, 3
    %v151 = vperm.slane %v96, 3
    %v152 = vmul.f32 %v144, %v150
    %v153 = vmul.f32 %v148, %v151
    %v154 = vadd.f32 %v140, %v152
    %v155 = vadd.f32 %v141, %v153
    %156 = vset.pattern.permute.xlu0 4
    %157 = vperm.xlu0 %156, %v98
    %v158 = vpop.permute.xlu0 %157
    %160 = vset.pattern.permute.xlu0 4
    %161 = vperm.xlu0 %160, %v99
    %v162 = vpop.permute.xlu0 %161
    %v164 = vperm.slane %v93, 4
    %v165 = vperm.slane %v96, 4
    %v166 = vmul.f32 %v158, %v164
    %v167 = vmul.f32 %v162, %v165
    %v168 = vadd.f32 %v154, %v166
    %v169 = vadd.f32 %v155, %v167
    %170 = vset.pattern.permute.xlu0 5
    %171 = vperm.xlu0 %170, %v98
    %v172 = vpop.permute.xlu0 %171
    %174 = vset.pattern.permute.xlu0 5
    %175 = vperm.xlu0 %174, %v99
    %v176 = vpop.permute.xlu0 %175
    %v178 = vperm.slane %v93, 5
    %v179 = vperm.slane %v96, 5
    %v180 = vmul.f32 %v172, %v178
    %v181 = vmul.f32 %v176, %v179
    %v182 = vadd.f32 %v168, %v180
    %v183 = vadd.f32 %v169, %v181
    %184 = vset.pattern.permute.xlu0 6
    %185 = vperm.xlu0 %184, %v98
    %v186 = vpop.permute.xlu0 %185
    %188 = vset.pattern.permute.xlu0 6
    %189 = vperm.xlu0 %188, %v99
    %v190 = vpop.permute.xlu0 %189
    %v192 = vperm.slane %v93, 6
    %v193 = vperm.slane %v96, 6
    %v194 = vmul.f32 %v186, %v192
    %v195 = vmul.f32 %v190, %v193
    %v196 = vadd.f32 %v182, %v194
    %v197 = vadd.f32 %v183, %v195
    %198 = vset.pattern.permute.xlu0 7
    %199 = vperm.xlu0 %198, %v98
    %v200 = vpop.permute.xlu0 %199
    %202 = vset.pattern.permute.xlu0 7
    %203 = vperm.xlu0 %202, %v99
    %v204 = vpop.permute.xlu0 %203
    %v206 = vperm.slane %v93, 7
    %v207 = vperm.slane %v96, 7
    %v208 = vmul.f32 %v200, %v206
    %v209 = vmul.f32 %v204, %v207
    %v210 = vadd.f32 %v196, %v208
    %v211 = vadd.f32 %v197, %v209
    %v212 = vmul.f32 %v210, 0.5
    %v213 = vmul.f32 %v211, 0.5
    %v214 = vmul.f32 %v210, 0.70710677
    %v215 = vmul.f32 %v211, 0.70710677
    %v216 = vmul.f32 %v214, %v214
    %v217 = vmin.f32 16.0, %v216
    %v218 = vmul.f32 %v217, 2.1237322e-06
    %v219 = vadd.f32 %v218, 0.00028619796
    %v220 = vmul.f32 %v217, %v219
    %v221 = vadd.f32 %v220, 0.0036580483
    %v222 = vmul.f32 %v217, %v221
    %v223 = vadd.f32 %v222, 0.05243302
    %v224 = vmul.f32 %v217, %v223
    %v225 = vadd.f32 %v224, 0.18741608
    %v226 = vmul.f32 %v217, %v225
    %v227 = vadd.f32 %v226, 1.1283791
    %v228 = vmul.f32 %v214, %v227
    %v229 = vmul.f32 %v217, 3.8918573e-05
    %v230 = vadd.f32 %v229, 0.001143296
    %v231 = vmul.f32 %v217, %v230
    %v232 = vadd.f32 %v231, 0.014752088
    %v233 = vmul.f32 %v217, %v232
    %v234 = vadd.f32 %v233, 0.112945676
    %v235 = vmul.f32 %v217, %v234
    %v236 = vadd.f32 %v235, 0.4994258
    %v237 = vmul.f32 %v217, %v236
    %v238 = vadd.f32 %v237, 1.0
    %v239 = vrcp.pop %v238
    %v240 = vmul.f32 %v238, %v239
    %v241 = vsub.f32 1.0, %v240
    %v242 = vmul.f32 %v239, %v241
    %v243 = vadd.f32 %v239, %v242
    %vm244 = vweird.f32 %v238
    %vm245 = vweird.f32 %v239
    %vm246 = vmor %vm244, %vm245
    %v247 = vsel %vm246, %v239, %v243
    %v248 = vand.u32 2147483647, %v238
    %vm249 = vcmp.eq.f32.partialorder %v248, 8.507059e+37
    %v250 = vand.u32 %v238, 2147483648
    %v251 = vor.u32 1.1754944e-38, %v250
    %v252 = vsel %vm249, %v251, %v247
    %v253 = vmul.f32 %v228, %v252
    %v254 = vmin.f32 %v253, 1.0
    %v255 = vmax.f32 %v254, -1.0
    %v256 = vmul.f32 %v215, %v215
    %v257 = vmin.f32 16.0, %v256
    %v258 = vmul.f32 %v257, 2.1237322e-06
    %v259 = vadd.f32 %v258, 0.00028619796
    %v260 = vmul.f32 %v257, %v259
    %v261 = vadd.f32 %v260, 0.0036580483
    %v262 = vmul.f32 %v257, %v261
    %v263 = vadd.f32 %v262, 0.05243302
    %v264 = vmul.f32 %v257, %v263
    %v265 = vadd.f32 %v264, 0.18741608
    %v266 = vmul.f32 %v257, %v265
    %v267 = vadd.f32 %v266, 1.1283791
    %v268 = vmul.f32 %v215, %v267
    %v269 = vmul.f32 %v257, 3.8918573e-05
    %v270 = vadd.f32 %v269, 0.001143296
    %v271 = vmul.f32 %v257, %v270
    %v272 = vadd.f32 %v271, 0.014752088
    %v273 = vmul.f32 %v257, %v272
    %v274 = vadd.f32 %v273, 0.112945676
    %v275 = vmul.f32 %v257, %v274
    %v276 = vadd.f32 %v275, 0.4994258
    %v277 = vmul.f32 %v257, %v276
    %v278 = vadd.f32 %v277, 1.0
    %v279 = vrcp.pop %v278
    %v280 = vmul.f32 %v278, %v279
    %v281 = vsub.f32 1.0, %v280
    %v282 = vmul.f32 %v279, %v281
    %v283 = vadd.f32 %v279, %v282
    %vm284 = vweird.f32 %v278
    %vm285 = vweird.f32 %v279
    %vm286 = vmor %vm284, %vm285
    %v287 = vsel %vm286, %v279, %v283
    %v288 = vand.u32 2147483647, %v278
    %vm289 = vcmp.eq.f32.partialorder %v288, 8.507059e+37
    %v290 = vand.u32 %v278, 2147483648
    %v291 = vor.u32 1.1754944e-38, %v290
    %v292 = vsel %vm289, %v291, %v287
    %v293 = vmul.f32 %v268, %v292
    %v294 = vmin.f32 %v293, 1.0
    %v295 = vmax.f32 %v294, -1.0
    %v296 = vadd.f32 %v255, 1.0
    %v297 = vadd.f32 %v295, 1.0
    %v298 = vmul.f32 %v212, %v296
    %v299 = vmul.f32 %v213, %v297
    %300 = vst.msk [vmem:[#allocation8] sm:$0xff] %vm68, %v298
    %301 = vst.msk [vmem:[#allocation8 + $0x8] sm:$0xff] %vm68, %v299
    // Predicated region
    $region26: #{tpu_custom_call.1} parent=1 // pred_check
      _
    $region27: #{tpu_custom_call.1} parent=1 // pred_check_branch
      %303 = sbr.rel (0) target = $region29
    $region28: #{tpu_custom_call.1} parent=1 // pred_region
      %305 = vsyncadd [#allocation4], 0
      %s306 = sshll.u32 [#allocation8], 4
      %s307 = int_to_ptr.vmem [resolvable:$true] %s306
      %s308 = sshll.u32 %s3, 4
      %s309 = int_to_ptr.hbm [resolvable:$true] %s308
      %314 = dma.vmem_to_hbm [thread:$0]  %s307, 256, %s309, [#allocation4], 128, 128, 8
    $region29: #{tpu_custom_call.1} parent=1 // pred_fallthru
      _
    // Predicated region
    $region30: #{tpu_custom_call.1} parent=1 // pred_check
      _
    $region31: #{tpu_custom_call.1} parent=1 // pred_check_branch
      %316 = sbr.rel (0) target = $region33
    $region32: #{tpu_custom_call.1} parent=1 // pred_region
      %318 = dma.done [#allocation4], 256
    $region33: #{tpu_custom_call.1} parent=1 // pred_fallthru
      _
    %319 = vsyncpa [#allocation3], 1
    %320 = vsyncpa [#allocation6], 1
    %321 = vsyncpa [#allocation4], 1

</llo_original>
